<compile_context>
chip_gen: v7x
topology: tpu7x:2x2x1
jax: 0.10.0
libtpu: 0.0.40
codegen_flags: <defaults>
</compile_context>

<pallas_src>
import functools
import math

import jax
import jax.numpy as jnp
from jax.experimental import pallas as pl
from jax.experimental.pallas import tpu as pltpu

_MIB = 1024 * 1024
_LANE = 128
_KRON_WEIGHT_LIMIT = 2 * _MIB     # fused path only while kron(Wh, Ww) is small


# --------------------------- chip configuration ------------------------------


def _tpu_generation() -> int:
    try:
        kind = jax.devices()[0].device_kind.lower()
    except Exception:
        return 6
    if "7" in kind:
        return 7
    if "v6" in kind:
        return 6
    if "v5" in kind:
        return 5
    return 4


def _chip_config():
    """Per-TensorCore (hbm_B_per_s, bf16_flops, vmem_limit, block_budget, min_steps)."""
    gen = _tpu_generation()
    if gen >= 7:
        # v7x: 64 MiB physical VMEM / TC, 3.2 TB/s HBM, 2 TCs -> want >=8 steps.
        return 3.2e12, 9.96e14, 48 * _MIB, 34 * _MIB, 8
    if gen == 6:
        return 1.35e12, 9.18e14, 96 * _MIB, 72 * _MIB, 4
    if gen == 5:
        return 0.82e12, 1.97e14, 96 * _MIB, 72 * _MIB, 4
    # Unknown / older generation: stay conservative.
    return 1.0e12, 2.75e14, 64 * _MIB, 40 * _MIB, 4


# ----------------------------- small helpers ---------------------------------


def _ceil_to(x: int, m: int) -> int:
    return -(-int(x) // m) * m


def _sublane(itemsize: int) -> int:
    # Minimal second-minor tile: 8 for f32, 16 for bf16 (packed sublanes).
    return 8 * max(1, 4 // itemsize)


def _padded_bytes(rows: int, cols: int, itemsize: int) -> int:
    """VMEM footprint of a (rows, cols) tile after (sublane, lane) padding."""
    return (_ceil_to(max(rows, 1), _sublane(itemsize))
            * _ceil_to(max(cols, 1), _LANE) * itemsize)


def _interp_matrix(in_size: int, out_size: int, mode: str, align_corners: bool):
    """Build (out_size, in_size) separable resampling matrix (PyTorch semantics)."""
    dst = jnp.arange(out_size, dtype=jnp.float32)
    if mode == "nearest":
        # PyTorch legacy 'nearest' (floor) semantics, not 'nearest-exact'.
        src = jnp.floor(dst * (in_size / out_size)).astype(jnp.int32)
        src = jnp.minimum(src, in_size - 1)
        return jax.nn.one_hot(src, in_size, dtype=jnp.float32)
    if mode != "bilinear":
        # TODO(synk): bicubic / area modes not implemented.
        raise NotImplementedError(f"mode={mode}")
    if align_corners:
        scale = (in_size - 1) / (out_size - 1) if out_size > 1 else 0.0
        src = dst * scale
    else:
        scale = in_size / out_size
        src = jnp.maximum((dst + 0.5) * scale - 0.5, 0.0)
    i0 = jnp.clip(jnp.floor(src).astype(jnp.int32), 0, in_size - 1)
    i1 = jnp.minimum(i0 + 1, in_size - 1)
    w1 = src - i0.astype(jnp.float32)
    w0 = 1.0 - w1
    return (w0[:, None] * jax.nn.one_hot(i0, in_size, dtype=jnp.float32)
            + w1[:, None] * jax.nn.one_hot(i1, in_size, dtype=jnp.float32))


def _choose_tb(nc, per_plane_bytes, plane_budget, align, min_steps):
    """Largest plane batch that fits the VMEM budget while keeping enough grid
    steps for DMA/compute overlap (and both v7x TensorCores busy)."""
    tb = max(1, plane_budget // max(1, per_plane_bytes))
    if nc >= min_steps:
        tb = min(tb, pl.cdiv(nc, min_steps))
    tb = min(tb, nc)
    if tb >= align:
        tb = (tb // align) * align      # sublane-aligned second-minor block dim
    elif tb != nc:
        tb = min(align, nc)             # satisfy the (8,128)/full-dim block rule
    return int(max(1, tb))


# ----------------------------- kernels ---------------------------------------


def _kron_kernel(x_ref, k_ref, o_ref):
    # x_ref: (TB, H*W); k_ref: (H*W, H_out*W_out); o_ref: (TB, H_out*W_out)
    o_ref[...] = jnp.dot(x_ref[...].astype(k_ref.dtype), k_ref[...],
                         preferred_element_type=jnp.float32).astype(o_ref.dtype)


def _separable_kernel(x_ref, wht_ref, wwt_ref, o_ref):
    # x_ref:   (TB, H_in, W_in)   plane batch
    # wht_ref: (H_in, H_out)      row-resample matrix, pre-transposed host-side
    # wwt_ref: (W_in, W_out)      col-resample matrix, pre-transposed host-side
    tb, h_in, w_in = x_ref.shape
    h_out = wht_ref.shape[1]
    w_out = wwt_ref.shape[1]
    cdt = wht_ref.dtype             # bf16 when the input is bf16, else f32

    # H pass: minor-dim transpose (XLU, overlaps the MXU) then ONE flat MXU
    # matmul with M = TB*W_in -- Wh is pushed into the MXU once, no per-plane
    # batched matmuls and no broadcast weight copies.
    xt = pltpu.einshape("bhw->bwh", x_ref[...].astype(cdt))          # (TB, W_in, H_in)
    t = jnp.dot(xt.reshape(tb * w_in, h_in), wht_ref[...],
                preferred_element_type=jnp.float32)                  # (TB*W_in, H_out)
    # Back to output layout; keep the intermediate in bf16 when the weights are
    # bf16 (halves VMEM and MXU passes; exact for dyadic scale factors).
    t = pltpu.einshape("bwo->bow", t.reshape(tb, w_in, h_out)).astype(cdt)
    y = jnp.dot(t.reshape(tb * h_out, w_in), wwt_ref[...],
                preferred_element_type=jnp.float32)                  # (TB*H_out, W_out)
    o_ref[...] = y.reshape(tb, h_out, w_out).astype(o_ref.dtype)


# ----------------------------- wrapper ---------------------------------------


@functools.partial(jax.jit, static_argnames=("scale_factor", "mode", "align_corners"))
def interpolate(x, scale_factor, mode="bilinear", align_corners=False):
    """Equivalent of Interpolate(scale_factor, mode, align_corners)(x), x in NCHW."""
    n, c, h_in, w_in = x.shape
    h_out = int(math.floor(h_in * scale_factor))   # PyTorch floors size * scale_factor
    w_out = int(math.floor(w_in * scale_factor))
    nc = n * c
    isz = jnp.dtype(x.dtype).itemsize

    hbm_bw, bf16_flops, vmem_limit, block_budget, min_steps = _chip_config()

    # bf16 weights only when the input is already bf16 (exact for dyadic scales
    # such as DPT's 2x; for non-dyadic scales bf16 rounding matches the input's
    # own precision anyway).  Accumulation is always f32.
    # TODO(synk): mixed f32-activation x bf16-weight matmuls could halve weight
    # traffic for f32 inputs with dyadic scales; skipped pending validation of
    # Mosaic's mixed-precision dot lowering.
    w_dtype = jnp.bfloat16 if x.dtype == jnp.bfloat16 else jnp.float32
    w_isz = jnp.dtype(w_dtype).itemsize

    wh = _interp_matrix(h_in, h_out, mode, align_corners)       # (H_out, H_in) f32
    ww = _interp_matrix(w_in, w_out, mode, align_corners)       # (W_out, W_in) f32

    k_dim = h_in * w_in
    n_dim = h_out * w_out
    plane_io_bytes = (k_dim + n_dim) * isz
    io_bytes = nc * plane_io_bytes

    # Fused-path gate: the kron weight must be small AND the step must stay
    # HBM-bound on this generation.  The kron formulation inflates FLOPs by
    # ~(h*w)/(w+h_out); with f32 weights it is already MXU-bound on v5e and on
    # v7x's 3.2 TB/s HBM, where the separable path wins.
    kron_weight_bytes = _padded_bytes(k_dim, n_dim, w_isz)
    mxu_flops = bf16_flops / (1.0 if w_dtype == jnp.bfloat16 else 6.0)
    kron_compute_s = 2.0 * k_dim * n_dim / mxu_flops             # per plane
    kron_dma_s = plane_io_bytes / hbm_bw                         # per plane
    use_kron = (kron_weight_bytes <= _KRON_WEIGHT_LIMIT
                and kron_compute_s <= kron_dma_s)

    if use_kron:
        # ---- fused path: lane-dense in/out blocks, single MXU matmul/step ----
        k_t = jnp.kron(wh, ww).T.astype(w_dtype)                 # (H*W, H_out*W_out)
        x2 = x.reshape(nc, k_dim)                                # free reshape (contiguous)
        # VMEM per plane: double-buffered in/out blocks + f32 result pre-cast.
        per_plane = (2 * _ceil_to(k_dim, _LANE) * isz
                     + 2 * _ceil_to(n_dim, _LANE) * isz
                     + _ceil_to(n_dim, _LANE) * 4)
        plane_budget = max(per_plane, block_budget - 2 * kron_weight_bytes)
        tb = _choose_tb(nc, per_plane, plane_budget, _sublane(isz), min_steps)
        out2 = pl.pallas_call(
            _kron_kernel,
            out_shape=jax.ShapeDtypeStruct((nc, n_dim), x.dtype),
            grid_spec=pltpu.PrefetchScalarGridSpec(
                num_scalar_prefetch=0,
                grid=(pl.cdiv(nc, tb),),
                in_specs=[
                    pl.BlockSpec((tb, k_dim), lambda i: (i, 0)),
                    pl.BlockSpec((k_dim, n_dim), lambda i: (0, 0)),
                ],
                out_specs=pl.BlockSpec((tb, n_dim), lambda i: (i, 0)),
            ),
            compiler_params=pltpu.CompilerParams(
                dimension_semantics=("parallel",),
                vmem_limit_bytes=int(vmem_limit),
            ),
            cost_estimate=pl.CostEstimate(
                flops=2 * nc * k_dim * n_dim,
                transcendentals=0,
                bytes_accessed=io_bytes + k_dim * n_dim * w_isz,
            ),
        )(x2, k_t)
        return out2.reshape(n, c, h_out, w_out)

    # ---- separable path: H pass then W pass, both as flat MXU matmuls -------
    wht = wh.T.astype(w_dtype)        # (H_in, H_out)  pre-transposed: no in-kernel .T
    wwt = ww.T.astype(w_dtype)        # (W_in, W_out)
    x3 = x.reshape(nc, h_in, w_in)
    cdt_isz = w_isz                   # intermediate dtype matches the weights
    # TODO(synk): for w_in not a multiple of 128 a lane-dense (tb, h*w) DMA plus
    # an in-kernel relayout would halve the padded input-block VMEM.
    per_plane = (2 * _padded_bytes(h_in, w_in, isz)        # input block, double-buffered
                 + 2 * _padded_bytes(h_out, w_out, isz)    # output block, double-buffered
                 + _padded_bytes(w_in, h_in, cdt_isz)      # x transposed (XLU copy)
                 + _padded_bytes(w_in, h_out, 4)           # H-pass f32 accumulator
                 + _padded_bytes(h_out, w_in, cdt_isz)     # re-transposed intermediate
                 + _padded_bytes(h_out, w_out, 4))         # W-pass f32 accumulator
    weight_bytes = 2 * (_padded_bytes(h_in, h_out, w_isz)
                        + _padded_bytes(w_in, w_out, w_isz))
    plane_budget = max(per_plane, block_budget - weight_bytes)
    tb = _choose_tb(nc, per_plane, plane_budget, 1, min_steps)
    out3 = pl.pallas_call(
        _separable_kernel,
        out_shape=jax.ShapeDtypeStruct((nc, h_out, w_out), x.dtype),
        grid_spec=pltpu.PrefetchScalarGridSpec(
            num_scalar_prefetch=0,
            grid=(pl.cdiv(nc, tb),),
            in_specs=[
                pl.BlockSpec((tb, h_in, w_in), lambda i: (i, 0, 0)),
                pl.BlockSpec((h_in, h_out), lambda i: (0, 0)),
                pl.BlockSpec((w_in, w_out), lambda i: (0, 0)),
            ],
            out_specs=pl.BlockSpec((tb, h_out, w_out), lambda i: (i, 0, 0)),
        ),
        compiler_params=pltpu.CompilerParams(
            dimension_semantics=("parallel",),
            vmem_limit_bytes=int(vmem_limit),
        ),
        cost_estimate=pl.CostEstimate(
            flops=2 * nc * w_in * h_out * (h_in + w_out),
            transcendentals=0,
            bytes_accessed=io_bytes + (wh.size + ww.size) * w_isz,
        ),
    )(x3, wht, wwt)
    return out3.reshape(n, c, h_out, w_out)


if __name__ == "__main__":
    key = jax.random.PRNGKey(0)
    # Interpolate has no learnable parameters; only an input tensor.
    x = jax.random.normal(key, (2, 4, 16, 16), dtype=jnp.float32)

    # DPT-head configuration: scale_factor=2, bilinear, align_corners=True.
    y = interpolate(x, scale_factor=2, mode="bilinear", align_corners=True)
    jax.block_until_ready(y)
    assert y.shape == (2, 4, 32, 32)
    wh = _interp_matrix(16, 32, "bilinear", True)
    ww = _interp_matrix(16, 32, "bilinear", True)
    y_ref = jnp.einsum("oh,nchw,pw->ncop", wh, x, ww)
    assert jnp.max(jnp.abs(y - y_ref)) < 1e-4

    # Larger planes exercise the flat-matmul separable path on every generation.
    x2 = jax.random.normal(jax.random.PRNGKey(1), (1, 8, 64, 64), dtype=jnp.float32)
    y2 = interpolate(x2, scale_factor=2, mode="bilinear", align_corners=True)
    jax.block_until_ready(y2)
    assert y2.shape == (1, 8, 128, 128)
    wh2 = _interp_matrix(64, 128, "bilinear", True)
    ww2 = _interp_matrix(64, 128, "bilinear", True)
    y2_ref = jnp.einsum("oh,nchw,pw->ncop", wh2, x2, ww2)
    assert jnp.max(jnp.abs(y2 - y2_ref)) < 1e-4

    # bf16 input exercises bf16 weights / bf16 intermediates (dyadic scale -> exact weights).
    xb = jax.random.normal(jax.random.PRNGKey(2), (1, 4, 16, 16), dtype=jnp.bfloat16)
    yb = interpolate(xb, scale_factor=2, mode="bilinear", align_corners=True)
    jax.block_until_ready(yb)
    assert yb.shape == (1, 4, 32, 32)
    yb_ref = jnp.einsum("oh,nchw,pw->ncop", wh, xb.astype(jnp.float32), ww)
    assert jnp.max(jnp.abs(yb.astype(jnp.float32) - yb_ref)) < 5e-2

    print("KERNEL_OK")
</pallas_src>

<mosaic_0001>
module attributes {stable_mosaic.version = 11 : i64} {
  func.func @_separable_kernel(%arg0: i32, %arg1: memref<2x16x16xf32, #tpu.memory_space<vmem>>, %arg2: memref<16x32xf32, #tpu.memory_space<vmem>>, %arg3: memref<16x32xf32, #tpu.memory_space<vmem>>, %arg4: memref<2x32x32xf32, #tpu.memory_space<vmem>>) attributes {dimension_semantics = [#tpu.dimension_semantics<parallel>], iteration_bounds = array<i64: 4>, scalar_prefetch = 0 : i64, scratch_operands = 0 : i64, tpu.core_type = #tpu.core_type<tc>, window_params = [{transform_indices = @transform_0, window_bounds = array<i64: 2, 16, 16>}, {pipeline_mode = #tpu.pipeline_mode<synchronous>, transform_indices = @transform_1, window_bounds = array<i64: 16, 32>}, {pipeline_mode = #tpu.pipeline_mode<synchronous>, transform_indices = @transform_2, window_bounds = array<i64: 16, 32>}, {transform_indices = @transform_3, window_bounds = array<i64: 2, 32, 32>}]} {
    %c0 = arith.constant 0 : index
    %c0_0 = arith.constant 0 : index
    %c0_1 = arith.constant 0 : index
    %0 = vector.load %arg1[%c0, %c0_0, %c0_1] : memref<2x16x16xf32, #tpu.memory_space<vmem>>, vector<2x16x16xf32>
    %1 = tpu.transpose %0, [0, 2, 1] : vector<2x16x16xf32> -> vector<2x16x16xf32>
    %2 = vector.shape_cast %1 : vector<2x16x16xf32> to vector<32x16xf32>
    %c0_2 = arith.constant 0 : index
    %c0_3 = arith.constant 0 : index
    %3 = vector.load %arg2[%c0_2, %c0_3] : memref<16x32xf32, #tpu.memory_space<vmem>>, vector<16x32xf32>
    %cst = arith.constant dense<0.000000e+00> : vector<32x32xf32>
    %4 = tpu.matmul %2, %3, %cst {dimension_numbers = #tpu.dot_dimension_numbers<[1], [0], [0], [1], [0, 0, 1, 1], [], []>} : vector<32x16xf32>, vector<16x32xf32>, vector<32x32xf32> -> vector<32x32xf32>
    %5 = vector.shape_cast %4 : vector<32x32xf32> to vector<2x16x32xf32>
    %6 = tpu.transpose %5, [0, 2, 1] : vector<2x16x32xf32> -> vector<2x32x16xf32>
    %7 = vector.shape_cast %6 : vector<2x32x16xf32> to vector<64x16xf32>
    %c0_4 = arith.constant 0 : index
    %c0_5 = arith.constant 0 : index
    %8 = vector.load %arg3[%c0_4, %c0_5] : memref<16x32xf32, #tpu.memory_space<vmem>>, vector<16x32xf32>
    %cst_6 = arith.constant dense<0.000000e+00> : vector<64x32xf32>
    %9 = tpu.matmul %7, %8, %cst_6 {dimension_numbers = #tpu.dot_dimension_numbers<[1], [0], [0], [1], [0, 0, 1, 1], [], []>} : vector<64x16xf32>, vector<16x32xf32>, vector<64x32xf32> -> vector<64x32xf32>
    %10 = vector.shape_cast %9 : vector<64x32xf32> to vector<2x32x32xf32>
    %c0_7 = arith.constant 0 : index
    %c0_8 = arith.constant 0 : index
    %c0_9 = arith.constant 0 : index
    %11 = vector.load %arg4[%c0_7, %c0_8, %c0_9] : memref<2x32x32xf32, #tpu.memory_space<vmem>>, vector<2x32x32xf32>
    tpu.vector_store %arg4[%c0_7, %c0_8, %c0_9], %10 {strides = array<i32>} : memref<2x32x32xf32, #tpu.memory_space<vmem>>, vector<2x32x32xf32>,
    return
  }
  func.func @transform_0(%arg0: i32) -> (i32, i32, i32) {
    %c0_i32 = arith.constant 0 : i32
    %c0_i32_0 = arith.constant 0 : i32
    %c0_i32_1 = arith.constant 0 : i32
    return %arg0, %c0_i32, %c0_i32_0 : i32, i32, i32
  }
  func.func @transform_1(%arg0: i32) -> (i32, i32) {
    %c0_i32 = arith.constant 0 : i32
    %c0_i32_0 = arith.constant 0 : i32
    %c0_i32_1 = arith.constant 0 : i32
    return %c0_i32, %c0_i32_0 : i32, i32
  }
  func.func @transform_2(%arg0: i32) -> (i32, i32) {
    %c0_i32 = arith.constant 0 : i32
    %c0_i32_0 = arith.constant 0 : i32
    %c0_i32_1 = arith.constant 0 : i32
    return %c0_i32, %c0_i32_0 : i32, i32
  }
  func.func @transform_3(%arg0: i32) -> (i32, i32, i32) {
    %c0_i32 = arith.constant 0 : i32
    %c0_i32_0 = arith.constant 0 : i32
    %c0_i32_1 = arith.constant 0 : i32
    return %arg0, %c0_i32, %c0_i32_0 : i32, i32, i32
  }
}

</mosaic_0001>

<llo_original>
// kernel: interpolate.1
$region0: #{interpolate.1}
  #allocation0 [shape = 'u32[]', space=smem, size = 0x4, offset = 0x4, fixed_abs, tag = 'smem constant byte address 0x4 - core index']
  #allocation1 [shape = 'u32[144,128]{1,0:T(1,128)}', space=vmem, size = 0x12000, scoped, tag = 'internal scratch']
  %s0 = inlined_call_operand.hbm [shape: f32[8,16,16], index: 0, kind: input, shape index: {}]
  %s1 = inlined_call_operand.hbm [shape: f32[16,32], index: 1, kind: input, shape index: {}, may-alias: {1,2}]
  %s2 = inlined_call_operand.hbm [shape: f32[16,32], index: 2, kind: input, shape index: {}, may-alias: {1,2}]
  %s3 = inlined_call_operand.hbm [shape: f32[8,32,32], index: 3, kind: output, shape index: {}]
  %s4 = sld [smem:[#allocation0]]
  $region57: #{interpolate.1} parent=0
    _
  %s6 = ssub.s32 1, %s4
  %s7 = scalar_select 0, %s6, %s4
  $region1: #{interpolate.1} parent=0
    #allocation2 [shape = 'u8[32768]{0}', space=vmem, size = 0x8000, scoped, tag = 'input window, operand 0']
    #allocation3 [shape = 's32[2]{0}', space=sflag, size = 0x8, scoped, tag = 'scoped memory for interpolate.1']
    #allocation4 [shape = 's32[2]{0}', space=sflag, size = 0x8, scoped, tag = 'scoped memory for interpolate.1']
    #allocation5 [shape = 'u8[8192]{0}', space=vmem, size = 0x2000, scoped, tag = 'input window, operand 1, single buffered']
    #allocation6 [shape = 's32[1]{0}', space=sflag, size = 0x4, scoped, tag = 'scoped memory for interpolate.1']
    #allocation7 [shape = 'u8[8192]{0}', space=vmem, size = 0x2000, scoped, tag = 'input window, operand 2, single buffered']
    #allocation8 [shape = 'u8[65536]{0}', space=vmem, size = 0x10000, scoped, tag = 'output window, operand 0']
    %8 = vsyncpa [#allocation3], 0
    %s9 = scalar_lea.sflag [#allocation3], 1
    %10 = vsyncpa %s9, 0
    %11 = vsyncpa [#allocation6], 0
    %12 = vsyncpa [#allocation4], 0
    %s13 = scalar_lea.sflag [#allocation4], 1
    %14 = vsyncpa %s13, 0
    loop: start=0, step=1, limit=6
    $region2: #{interpolate.1} parent=1 // loop_pre_header
      _
    $region3: #{interpolate.1} parent=1 // loop_header
      %s16 = sphi 0, %s20
      %p17 = scmp.ge.s32.totalorder %s16, 6
      %s26 = sphi 0, %s28
      %s29 = sphi 0, %s26
      %s30 = sphi 0, %s29
      %s46 = sphi 0, %s30
      %s50 = sphi 0, %s50
      %s52 = sphi 0, %s50
      %s53 = sphi 0, %s52
      %s67 = sphi 0, %s53
      %s71 = sphi 0, %s71
      %s73 = sphi 0, %s71
      %s74 = sphi 0, %s73
      %s88 = sphi 0, %s74
      %s94 = sphi 0, %s96
      %s97 = sphi 0, %s94
      %s98 = sphi 0, %s97
      %s114 = sphi 0, %s98
    $region4: #{interpolate.1} parent=1 // loop_header_branch
      %19 = sbr.rel (%p17) target = $region8
    $region5: #{interpolate.1} parent=1 // loop_body
      %s21 = ssub.s32 %s16, 1
      %s22 = ssub.s32 %s16, 2
      %s23 = sadd.s32 %s16, 1
      %s24 = ssub.s32 %s16, %s23
      %p25 = scmp.eq.s32.totalorder %s24, 0
      %s27 = sadd.s32 %s26, 1
      %s28 = scalar_select %p25, %s26, %s27
      %p31 = pneg %p25
      %p32 = scmp.eq.s32.totalorder %s16, 3
      %p33 = por %p31, %p32
      %p34 = scmp.ne.s32.totalorder %s26, %s29
      %p35 = scmp.eq.s32.totalorder %s16, 0
      %p36 = por %p34, %p35
      %p37 = scmp.ne.s32.totalorder %s26, %s29
      %p38 = scmp.eq.s32.totalorder %s21, 3
      %p39 = por %p37, %p38
      %p40 = scmp.ne.s32.totalorder %s29, %s30
      %p41 = scmp.eq.s32.totalorder %s21, 0
      %p42 = por %p40, %p41
      %p43 = scmp.ne.s32.totalorder %s29, %s30
      %p44 = scmp.eq.s32.totalorder %s22, 3
      %p45 = por %p43, %p44
      %p47 = scmp.ne.s32.totalorder %s30, %s46
      %p48 = scmp.eq.s32.totalorder %s22, 0
      %p49 = por %p47, %p48
      %s51 = sadd.s32 %s50, 1
      %p54 = scmp.eq.s32.totalorder %s16, 3
      %p55 = scmp.ne.s32.totalorder %s50, %s52
      %p56 = scmp.eq.s32.totalorder %s16, 0
      %p57 = por %p55, %p56
      %p58 = scmp.ne.s32.totalorder %s50, %s52
      %p59 = scmp.eq.s32.totalorder %s21, 3
      %p60 = por %p58, %p59
      %p61 = scmp.ne.s32.totalorder %s52, %s53
      %p62 = scmp.eq.s32.totalorder %s21, 0
      %p63 = por %p61, %p62
      %p64 = scmp.ne.s32.totalorder %s52, %s53
      %p65 = scmp.eq.s32.totalorder %s22, 3
      %p66 = por %p64, %p65
      %p68 = scmp.ne.s32.totalorder %s53, %s67
      %p69 = scmp.eq.s32.totalorder %s22, 0
      %p70 = por %p68, %p69
      %s72 = sadd.s32 %s71, 1
      %p75 = scmp.eq.s32.totalorder %s16, 3
      %p76 = scmp.ne.s32.totalorder %s71, %s73
      %p77 = scmp.eq.s32.totalorder %s16, 0
      %p78 = por %p76, %p77
      %p79 = scmp.ne.s32.totalorder %s71, %s73
      %p80 = scmp.eq.s32.totalorder %s21, 3
      %p81 = por %p79, %p80
      %p82 = scmp.ne.s32.totalorder %s73, %s74
      %p83 = scmp.eq.s32.totalorder %s21, 0
      %p84 = por %p82, %p83
      %p85 = scmp.ne.s32.totalorder %s73, %s74
      %p86 = scmp.eq.s32.totalorder %s22, 3
      %p87 = por %p85, %p86
      %p89 = scmp.ne.s32.totalorder %s74, %s88
      %p90 = scmp.eq.s32.totalorder %s22, 0
      %p91 = por %p89, %p90
      %s92 = ssub.s32 %s16, %s23
      %p93 = scmp.eq.s32.totalorder %s92, 0
      %s95 = sadd.s32 %s94, 1
      %s96 = scalar_select %p93, %s94, %s95
      %p99 = pneg %p93
      %p100 = scmp.eq.s32.totalorder %s16, 3
      %p101 = por %p99, %p100
      %p102 = scmp.ne.s32.totalorder %s94, %s97
      %p103 = scmp.eq.s32.totalorder %s16, 0
      %p104 = por %p102, %p103
      %p105 = scmp.ne.s32.totalorder %s94, %s97
      %p106 = scmp.eq.s32.totalorder %s21, 3
      %p107 = por %p105, %p106
      %p108 = scmp.ne.s32.totalorder %s97, %s98
      %p109 = scmp.eq.s32.totalorder %s21, 0
      %p110 = por %p108, %p109
      %p111 = scmp.ne.s32.totalorder %s97, %s98
      %p112 = scmp.eq.s32.totalorder %s22, 3
      %p113 = por %p111, %p112
      %p115 = scmp.ne.s32.totalorder %s98, %s114
      %p116 = scmp.eq.s32.totalorder %s22, 0
      %p117 = por %p115, %p116
      %p118 = scmp.le.s32.totalorder 1, %s16
      %p119 = scmp.lt.s32.totalorder %s16, 5
      %p120 = pnand %p118, %p119
      %p121 = pneg %p120
      // Predicated region
      $region9: #{interpolate.1} parent=5 // pred_check
        _
      $region10: #{interpolate.1} parent=5 // pred_check_branch
        %123 = sbr.rel (%p120) target = $region12
      $region11: #{interpolate.1} parent=5 // pred_region
        %s124 = ssub.s32 %s16, 1
        // Predicated region
        $region13: #{interpolate.1} parent=11 // pred_check
          %p125 = pneg %p63
        $region14: #{interpolate.1} parent=11 // pred_check_branch
          %127 = sbr.rel (%p125) target = $region16
        $region15: #{interpolate.1} parent=11 // pred_region
          %s129 = ssub.s32 256, 256
          %130 = vsyncadd [#allocation6], %s129
          %s131 = sshll.u32 [#allocation5], 4
          %s132 = int_to_ptr.vmem [resolvable:$true] %s131
          %137 = dma.hbm_to_vmem [thread:$0]  %s1, 256, %s132, [#allocation6], 128, 128, 8
        $region16: #{interpolate.1} parent=11 // pred_fallthru
          _
        // Predicated region
        $region17: #{interpolate.1} parent=11 // pred_check
          %p138 = pneg %p84
        $region18: #{interpolate.1} parent=11 // pred_check_branch
          %140 = sbr.rel (%p138) target = $region20
        $region19: #{interpolate.1} parent=11 // pred_region
          %s142 = ssub.s32 256, 256
          %143 = vsyncadd [#allocation6], %s142
          %s144 = sshll.u32 [#allocation7], 4
          %s145 = int_to_ptr.vmem [resolvable:$true] %s144
          %150 = dma.hbm_to_vmem [thread:$0]  %s2, 256, %s145, [#allocation6], 128, 128, 8
        $region20: #{interpolate.1} parent=11 // pred_fallthru
          _
      $region12: #{interpolate.1} parent=5 // pred_fallthru
        _
      %p151 = scmp.lt.s32.totalorder %s16, 4
      // Predicated region
      $region21: #{interpolate.1} parent=5 // pred_check
        %p152 = pneg %p151
      $region22: #{interpolate.1} parent=5 // pred_check_branch
        %154 = sbr.rel (%p152) target = $region24
      $region23: #{interpolate.1} parent=5 // pred_region
        // Predicated region
        $region25: #{interpolate.1} parent=23 // pred_check
          %p155 = pneg %p36
        $region26: #{interpolate.1} parent=23 // pred_check_branch
          %157 = sbr.rel (%p155) target = $region28
        $region27: #{interpolate.1} parent=23 // pred_region
          %s158 = sand.u32 %s26, 1
          %s159 = scalar_lea.sflag [#allocation3], %s158
          %s160 = sand.u32 %s26, 1
          %s161 = smul.addr %s160, 32
          %s162 = scalar_lea.vmem [#allocation2], %s161
          %s163 = smul.u32 2, %s16
          %s165 = ssub.s32 512, 512
          %166 = vsyncadd %s159, %s165
          %s167 = smul.addr %s163, 2
          %s168 = smul.addr %s167, 128
          %s169 = scalar_lea.hbm %s0, %s168
          %s170 = sshll.u32 %s162, 4
          %s171 = int_to_ptr.vmem [resolvable:$true] %s170
          %176 = dma.hbm_to_vmem [thread:$0]  %s169, 512, %s171, %s159, 128, 128, 8
        $region28: #{interpolate.1} parent=23 // pred_fallthru
          _
      $region24: #{interpolate.1} parent=5 // pred_fallthru
        _
      %p177 = scmp.le.s32.totalorder 1, %s16
      %p178 = scmp.lt.s32.totalorder %s16, 5
      %p179 = pnand %p177, %p178
      %p180 = pneg %p179
      // Predicated region
      $region29: #{interpolate.1} parent=5 // pred_check
        _
      $region30: #{interpolate.1} parent=5 // pred_check_branch
        %182 = sbr.rel (%p179) target = $region32
      $region31: #{interpolate.1} parent=5 // pred_region
        %s183 = ssub.s32 %s16, 1
        %s184 = sand.u32 %s29, 1
        %s185 = scalar_lea.sflag [#allocation3], %s184
        %s186 = sand.u32 %s29, 1
        %s187 = smul.addr %s186, 32
        %s188 = scalar_lea.vmem [#allocation2], %s187
        // Predicated region
        $region33: #{interpolate.1} parent=31 // pred_check
          %p189 = pneg %p42
        $region34: #{interpolate.1} parent=31 // pred_check_branch
          %191 = sbr.rel (%p189) target = $region36
        $region35: #{interpolate.1} parent=31 // pred_region
          %192 = dma.done %s185, 512
        $region36: #{interpolate.1} parent=31 // pred_fallthru
          _
        // Predicated region
        $region37: #{interpolate.1} parent=31 // pred_check
          %p193 = pneg %p63
        $region38: #{interpolate.1} parent=31 // pred_check_branch
          %195 = sbr.rel (%p193) target = $region40
        $region39: #{interpolate.1} parent=31 // pred_region
          %196 = dma.done [#allocation6], 256
        $region40: #{interpolate.1} parent=31 // pred_fallthru
          _
        // Predicated region
        $region41: #{interpolate.1} parent=31 // pred_check
          %p197 = pneg %p84
        $region42: #{interpolate.1} parent=31 // pred_check_branch
          %199 = sbr.rel (%p197) target = $region44
        $region43: #{interpolate.1} parent=31 // pred_region
          %200 = dma.done [#allocation6], 256
        $region44: #{interpolate.1} parent=31 // pred_fallthru
          _
        %s201 = sand.u32 %s29, 1
        %s202 = scalar_lea.sflag [#allocation3], %s201
        %s203 = sand.u32 %s29, 1
        %s204 = smul.addr %s203, 32
        %s205 = scalar_lea.vmem [#allocation2], %s204
        %p206 = pneg %p42
        %p207 = pneg %p39
        %p208 = pneg %p63
        %p209 = pneg %p60
        %p210 = pneg %p84
        %p211 = pneg %p81
        %p212 = pneg %p110
        %p213 = pneg %p107
        %s214 = sand.u32 %s97, 1
        %s215 = scalar_lea.sflag [#allocation4], %s214
        %s216 = sand.u32 %s97, 1
        %s217 = smul.addr %s216, 64
        %s218 = scalar_lea.vmem [#allocation8], %s217
        %s219 = smul.u32 2, %s21
        %s220 = smul.u32 2, %s21
        %v221 = vld [vmem:[%s188] sm:$0xff]
        %v222 = vld [vmem:[%s188 + $0x8] sm:$0xff]
        %v223 = vld [vmem:[%s188 + $0x10] sm:$0xff]
        %v224 = vld [vmem:[%s188 + $0x18] sm:$0xff]
        %225 = vxpose.xlu0.b32.start [1/16] %v221, 128
        %226 = vxpose.xlu0.b32.cont [2/16] %v222, 128
        %227 = vxpose.xlu0.b32.cont [3/16] 0.0, 128
        %228 = vxpose.xlu0.b32.cont [4/16] 0.0, 128
        %229 = vxpose.xlu0.b32.cont [5/16] 0.0, 128
        %230 = vxpose.xlu0.b32.cont [6/16] 0.0, 128
        %231 = vxpose.xlu0.b32.cont [7/16] 0.0, 128
        %232 = vxpose.xlu0.b32.cont [8/16] 0.0, 128
        %233 = vxpose.xlu0.b32.cont [9/16] 0.0, 128
        %234 = vxpose.xlu0.b32.cont [10/16] 0.0, 128
        %235 = vxpose.xlu0.b32.cont [11/16] 0.0, 128
        %236 = vxpose.xlu0.b32.cont [12/16] 0.0, 128
        %237 = vxpose.xlu0.b32.cont [13/16] 0.0, 128
        %238 = vxpose.xlu0.b32.cont [14/16] 0.0, 128
        %239 = vxpose.xlu0.b32.cont [15/16] 0.0, 128
        %240 = vxpose.xlu0.b32.end [16/16] 0.0, 128
        %v241 = vpop.trf.xlu0
        %v242 = vpop.trf.xlu0
        %v243 = vpop.trf.xlu0
        %v244 = vpop.trf.xlu0
        %v245 = vpop.trf.xlu0
        %v246 = vpop.trf.xlu0
        %v247 = vpop.trf.xlu0
        %v248 = vpop.trf.xlu0
        %v249 = vpop.trf.xlu0
        %v250 = vpop.trf.xlu0
        %v251 = vpop.trf.xlu0
        %v252 = vpop.trf.xlu0
        %v253 = vpop.trf.xlu0
        %v254 = vpop.trf.xlu0
        %v255 = vpop.trf.xlu0
        %v256 = vpop.trf.xlu0
        %257 = vxpose.xlu0.b32.start [1/16] %v223, 128
        %258 = vxpose.xlu0.b32.cont [2/16] %v224, 128
        %259 = vxpose.xlu0.b32.cont [3/16] 0.0, 128
        %260 = vxpose.xlu0.b32.cont [4/16] 0.0, 128
        %261 = vxpose.xlu0.b32.cont [5/16] 0.0, 128
        %262 = vxpose.xlu0.b32.cont [6/16] 0.0, 128
        %263 = vxpose.xlu0.b32.cont [7/16] 0.0, 128
        %264 = vxpose.xlu0.b32.cont [8/16] 0.0, 128
        %265 = vxpose.xlu0.b32.cont [9/16] 0.0, 128
        %266 = vxpose.xlu0.b32.cont [10/16] 0.0, 128
        %267 = vxpose.xlu0.b32.cont [11/16] 0.0, 128
        %268 = vxpose.xlu0.b32.cont [12/16] 0.0, 128
        %269 = vxpose.xlu0.b32.cont [13/16] 0.0, 128
        %270 = vxpose.xlu0.b32.cont [14/16] 0.0, 128
        %271 = vxpose.xlu0.b32.cont [15/16] 0.0, 128
        %272 = vxpose.xlu0.b32.end [16/16] 0.0, 128
        %v273 = vpop.trf.xlu0
        %v274 = vpop.trf.xlu0
        %v275 = vpop.trf.xlu0
        %v276 = vpop.trf.xlu0
        %v277 = vpop.trf.xlu0
        %v278 = vpop.trf.xlu0
        %v279 = vpop.trf.xlu0
        %v280 = vpop.trf.xlu0
        %v281 = vpop.trf.xlu0
        %v282 = vpop.trf.xlu0
        %v283 = vpop.trf.xlu0
        %v284 = vpop.trf.xlu0
        %v285 = vpop.trf.xlu0
        %v286 = vpop.trf.xlu0
        %v287 = vpop.trf.xlu0
        %v288 = vpop.trf.xlu0
        %v289 = vld [vmem:[#allocation5] sm:$0xff]
        %v290 = vld [vmem:[#allocation5 + $0x8] sm:$0xff]
        %vm291 = vcmask 130048
        %v293 = vsel %vm291, %v241, 0
        %v296 = vsel %vm291, %v242, 0
        %v299 = vsel %vm291, %v273, 0
        %v302 = vsel %vm291, %v274, 0
        %304 = vmatprep.subr.mxu0 0.0
        %305 = vmatpush1.msra.mxu0 %v289
        %306 = vmatprep.subr.mxu0 0.0
        %307 = vmatpush1.msra.mxu0 %v290
        %308 = vmatprep.subr.mxu0 0.0
        %309 = vmatpush1.msra.mxu0 0.0
        %310 = vmatprep.subr.mxu0 0.0
        %311 = vmatpush1.msra.mxu0 0.0
        %312 = vmatprep.subr.mxu0 0.0
        %313 = vmatpush1.msra.mxu0 0.0
        %314 = vmatprep.subr.mxu0 0.0
        %315 = vmatpush1.msra.mxu0 0.0
        %316 = vmatprep.subr.mxu0 0.0
        %317 = vmatpush1.msra.mxu0 0.0
        %318 = vmatprep.subr.mxu0 0.0
        %319 = vmatpush1.msra.mxu0 0.0
        %320 = vmatprep.subr.mxu0 0.0
        %321 = vmatpush1.msra.mxu0 0.0
        %322 = vmatprep.subr.mxu0 0.0
        %323 = vmatpush1.msra.mxu0 0.0
        %324 = vmatprep.subr.mxu0 0.0
        %325 = vmatpush1.msra.mxu0 0.0
        %326 = vmatprep.subr.mxu0 0.0
        %327 = vmatpush1.msra.mxu0 0.0
        %328 = vmatprep.subr.mxu0 0.0
        %329 = vmatpush1.msra.mxu0 0.0
        %330 = vmatprep.subr.mxu0 0.0
        %331 = vmatpush1.msra.mxu0 0.0
        %332 = vmatprep.subr.mxu0 0.0
        %333 = vmatpush1.msra.mxu0 0.0
        %334 = vmatprep.subr.mxu0 0.0
        %335 = vmatpush1.msra.mxu0 0.0
        %336 = vmatprep.subr.mxu0 0.0
        %337 = vmatpush1.msra.mxu0 0.0
        %338 = vmatprep.subr.mxu0 0.0
        %339 = vmatpush1.msra.mxu0 0.0
        %340 = vmatprep.subr.mxu0 0.0
        %341 = vmatpush1.msra.mxu0 0.0
        %342 = vmatprep.subr.mxu0 0.0
        %343 = vmatpush1.msra.mxu0 0.0
        %344 = vmatprep.subr.mxu0 0.0
        %345 = vmatpush1.msra.mxu0 0.0
        %346 = vmatprep.subr.mxu0 0.0
        %347 = vmatpush1.msra.mxu0 0.0
        %348 = vmatprep.subr.mxu0 0.0
        %349 = vmatpush1.msra.mxu0 0.0
        %350 = vmatprep.subr.mxu0 0.0
        %351 = vmatpush1.msra.mxu0 0.0
        %352 = vmatprep.subr.mxu0 0.0
        %353 = vmatpush1.msra.mxu0 0.0
        %354 = vmatprep.subr.mxu0 0.0
        %355 = vmatpush1.msra.mxu0 0.0
        %356 = vmatprep.subr.mxu0 0.0
        %357 = vmatpush1.msra.mxu0 0.0
        %358 = vmatprep.subr.mxu0 0.0
        %359 = vmatpush1.msra.mxu0 0.0
        %360 = vmatprep.subr.mxu0 0.0
        %361 = vmatpush1.msra.mxu0 0.0
        %362 = vmatprep.subr.mxu0 0.0
        %363 = vmatpush1.msra.mxu0 0.0
        %364 = vmatprep.subr.mxu0 0.0
        %365 = vmatpush1.msra.mxu0 0.0
        %366 = vmatprep.subr.mxu0 0.0
        %367 = vmatpush1.msra.mxu0 0.0
        %368 = vmatprep.mubr.f32.mxu0 0.0
        %369 = vmatmul.mubr.f32.gmra.mrb[0].mxu0 %v293
        %v370 = vpop.f32.mrb[0].mxu0
        %v371 = vadd.f32 0.0, %v370
        %v372 = vpop.f32.mrb[0].mxu0
        %373 = vmatprep.mubr.f32.mxu0 0.0
        %374 = vmatmul.mubr.f32.gmra.mrb[0].mxu0 %v296
        %v375 = vpop.f32.mrb[0].mxu0
        %v376 = vadd.f32 0.0, %v375
        %v377 = vpop.f32.mrb[0].mxu0
        %378 = vmatprep.mubr.f32.mxu0 0.0
        %379 = vmatmul.mubr.f32.gmra.mrb[0].mxu0 %v299
        %v380 = vpop.f32.mrb[0].mxu0
        %v381 = vadd.f32 0.0, %v380
        %v382 = vpop.f32.mrb[0].mxu0
        %383 = vmatprep.mubr.f32.mxu0 0.0
        %384 = vmatmul.mubr.f32.gmra.mrb[0].mxu0 %v302
        %v385 = vpop.f32.mrb[0].mxu0
        %v386 = vadd.f32 0.0, %v385
        %v387 = vpop.f32.mrb[0].mxu0
        %388 = vdwg.mxu0
        %389 = vxpose.xlu0.b32.start [1/16] %v371, 128
        %390 = vxpose.xlu0.b32.cont [2/16] %v376, 128
        %391 = vxpose.xlu0.b32.cont [3/16] 0.0, 128
        %392 = vxpose.xlu0.b32.cont [4/16] 0.0, 128
        %393 = vxpose.xlu0.b32.cont [5/16] 0.0, 128
        %394 = vxpose.xlu0.b32.cont [6/16] 0.0, 128
        %395 = vxpose.xlu0.b32.cont [7/16] 0.0, 128
        %396 = vxpose.xlu0.b32.cont [8/16] 0.0, 128
        %397 = vxpose.xlu0.b32.cont [9/16] 0.0, 128
        %398 = vxpose.xlu0.b32.cont [10/16] 0.0, 128
        %399 = vxpose.xlu0.b32.cont [11/16] 0.0, 128
        %400 = vxpose.xlu0.b32.cont [12/16] 0.0, 128
        %401 = vxpose.xlu0.b32.cont [13/16] 0.0, 128
        %402 = vxpose.xlu0.b32.cont [14/16] 0.0, 128
        %403 = vxpose.xlu0.b32.cont [15/16] 0.0, 128
        %404 = vxpose.xlu0.b32.end [16/16] 0.0, 128
        %v405 = vpop.trf.xlu0
        %v406 = vpop.trf.xlu0
        %v407 = vpop.trf.xlu0
        %v408 = vpop.trf.xlu0
        %v409 = vpop.trf.xlu0
        %v410 = vpop.trf.xlu0
        %v411 = vpop.trf.xlu0
        %v412 = vpop.trf.xlu0
        %v413 = vpop.trf.xlu0
        %v414 = vpop.trf.xlu0
        %v415 = vpop.trf.xlu0
        %v416 = vpop.trf.xlu0
        %v417 = vpop.trf.xlu0
        %v418 = vpop.trf.xlu0
        %v419 = vpop.trf.xlu0
        %v420 = vpop.trf.xlu0
        %421 = vxpose.xlu0.b32.start [1/16] %v381, 128
        %422 = vxpose.xlu0.b32.cont [2/16] %v386, 128
        %423 = vxpose.xlu0.b32.cont [3/16] 0.0, 128
        %424 = vxpose.xlu0.b32.cont [4/16] 0.0, 128
        %425 = vxpose.xlu0.b32.cont [5/16] 0.0, 128
        %426 = vxpose.xlu0.b32.cont [6/16] 0.0, 128
        %427 = vxpose.xlu0.b32.cont [7/16] 0.0, 128
        %428 = vxpose.xlu0.b32.cont [8/16] 0.0, 128
        %429 = vxpose.xlu0.b32.cont [9/16] 0.0, 128
        %430 = vxpose.xlu0.b32.cont [10/16] 0.0, 128
        %431 = vxpose.xlu0.b32.cont [11/16] 0.0, 128
        %432 = vxpose.xlu0.b32.cont [12/16] 0.0, 128
        %433 = vxpose.xlu0.b32.cont [13/16] 0.0, 128
        %434 = vxpose.xlu0.b32.cont [14/16] 0.0, 128
        %435 = vxpose.xlu0.b32.cont [15/16] 0.0, 128
        %436 = vxpose.xlu0.b32.end [16/16] 0.0, 128
        %v437 = vpop.trf.xlu0
        %v438 = vpop.trf.xlu0
        %v439 = vpop.trf.xlu0
        %v440 = vpop.trf.xlu0
        %v441 = vpop.trf.xlu0
        %v442 = vpop.trf.xlu0
        %v443 = vpop.trf.xlu0
        %v444 = vpop.trf.xlu0
        %v445 = vpop.trf.xlu0
        %v446 = vpop.trf.xlu0
        %v447 = vpop.trf.xlu0
        %v448 = vpop.trf.xlu0
        %v449 = vpop.trf.xlu0
        %v450 = vpop.trf.xlu0
        %v451 = vpop.trf.xlu0
        %v452 = vpop.trf.xlu0
        %v453 = vld [vmem:[#allocation7] sm:$0xff]
        %v454 = vld [vmem:[#allocation7 + $0x8] sm:$0xff]
        %v456 = vsel %vm291, %v405, 0
        %v459 = vsel %vm291, %v406, 0
        %v462 = vsel %vm291, %v407, 0
        %v465 = vsel %vm291, %v408, 0
        %v468 = vsel %vm291, %v437, 0
        %v471 = vsel %vm291, %v438, 0
        %v474 = vsel %vm291, %v439, 0
        %v477 = vsel %vm291, %v440, 0
        %479 = vmatprep.subr.mxu0 0.0
        %480 = vmatpush1.msra.mxu0 %v453
        %481 = vmatprep.subr.mxu0 0.0
        %482 = vmatpush1.msra.mxu0 %v454
        %483 = vmatprep.subr.mxu0 0.0
        %484 = vmatpush1.msra.mxu0 0.0
        %485 = vmatprep.subr.mxu0 0.0
        %486 = vmatpush1.msra.mxu0 0.0
        %487 = vmatprep.subr.mxu0 0.0
        %488 = vmatpush1.msra.mxu0 0.0
        %489 = vmatprep.subr.mxu0 0.0
        %490 = vmatpush1.msra.mxu0 0.0
        %491 = vmatprep.subr.mxu0 0.0
        %492 = vmatpush1.msra.mxu0 0.0
        %493 = vmatprep.subr.mxu0 0.0
        %494 = vmatpush1.msra.mxu0 0.0
        %495 = vmatprep.subr.mxu0 0.0
        %496 = vmatpush1.msra.mxu0 0.0
        %497 = vmatprep.subr.mxu0 0.0
        %498 = vmatpush1.msra.mxu0 0.0
        %499 = vmatprep.subr.mxu0 0.0
        %500 = vmatpush1.msra.mxu0 0.0
        %501 = vmatprep.subr.mxu0 0.0
        %502 = vmatpush1.msra.mxu0 0.0
        %503 = vmatprep.subr.mxu0 0.0
        %504 = vmatpush1.msra.mxu0 0.0
        %505 = vmatprep.subr.mxu0 0.0
        %506 = vmatpush1.msra.mxu0 0.0
        %507 = vmatprep.subr.mxu0 0.0
        %508 = vmatpush1.msra.mxu0 0.0
        %509 = vmatprep.subr.mxu0 0.0
        %510 = vmatpush1.msra.mxu0 0.0
        %511 = vmatprep.subr.mxu0 0.0
        %512 = vmatpush1.msra.mxu0 0.0
        %513 = vmatprep.subr.mxu0 0.0
        %514 = vmatpush1.msra.mxu0 0.0
        %515 = vmatprep.subr.mxu0 0.0
        %516 = vmatpush1.msra.mxu0 0.0
        %517 = vmatprep.subr.mxu0 0.0
        %518 = vmatpush1.msra.mxu0 0.0
        %519 = vmatprep.subr.mxu0 0.0
        %520 = vmatpush1.msra.mxu0 0.0
        %521 = vmatprep.subr.mxu0 0.0
        %522 = vmatpush1.msra.mxu0 0.0
        %523 = vmatprep.subr.mxu0 0.0
        %524 = vmatpush1.msra.mxu0 0.0
        %525 = vmatprep.subr.mxu0 0.0
        %526 = vmatpush1.msra.mxu0 0.0
        %527 = vmatprep.subr.mxu0 0.0
        %528 = vmatpush1.msra.mxu0 0.0
        %529 = vmatprep.subr.mxu0 0.0
        %530 = vmatpush1.msra.mxu0 0.0
        %531 = vmatprep.subr.mxu0 0.0
        %532 = vmatpush1.msra.mxu0 0.0
        %533 = vmatprep.subr.mxu0 0.0
        %534 = vmatpush1.msra.mxu0 0.0
        %535 = vmatprep.subr.mxu0 0.0
        %536 = vmatpush1.msra.mxu0 0.0
        %537 = vmatprep.subr.mxu0 0.0
        %538 = vmatpush1.msra.mxu0 0.0
        %539 = vmatprep.subr.mxu0 0.0
        %540 = vmatpush1.msra.mxu0 0.0
        %541 = vmatprep.subr.mxu0 0.0
        %542 = vmatpush1.msra.mxu0 0.0
        %543 = vmatprep.mubr.f32.mxu0 0.0
        %544 = vmatmul.mubr.f32.gmra.mrb[0].mxu0 %v456
        %v545 = vpop.f32.mrb[0].mxu0
        %v546 = vadd.f32 0.0, %v545
        %v547 = vpop.f32.mrb[0].mxu0
        %548 = vmatprep.mubr.f32.mxu0 0.0
        %549 = vmatmul.mubr.f32.gmra.mrb[0].mxu0 %v459
        %v550 = vpop.f32.mrb[0].mxu0
        %v551 = vadd.f32 0.0, %v550
        %v552 = vpop.f32.mrb[0].mxu0
        %553 = vmatprep.mubr.f32.mxu0 0.0
        %554 = vmatmul.mubr.f32.gmra.mrb[0].mxu0 %v462
        %v555 = vpop.f32.mrb[0].mxu0
        %v556 = vadd.f32 0.0, %v555
        %v557 = vpop.f32.mrb[0].mxu0
        %558 = vmatprep.mubr.f32.mxu0 0.0
        %559 = vmatmul.mubr.f32.gmra.mrb[0].mxu0 %v465
        %v560 = vpop.f32.mrb[0].mxu0
        %v561 = vadd.f32 0.0, %v560
        %v562 = vpop.f32.mrb[0].mxu0
        %563 = vmatprep.mubr.f32.mxu0 0.0
        %564 = vmatmul.mubr.f32.gmra.mrb[0].mxu0 %v468
        %v565 = vpop.f32.mrb[0].mxu0
        %v566 = vadd.f32 0.0, %v565
        %v567 = vpop.f32.mrb[0].mxu0
        %568 = vmatprep.mubr.f32.mxu0 0.0
        %569 = vmatmul.mubr.f32.gmra.mrb[0].mxu0 %v471
        %v570 = vpop.f32.mrb[0].mxu0
        %v571 = vadd.f32 0.0, %v570
        %v572 = vpop.f32.mrb[0].mxu0
        %573 = vmatprep.mubr.f32.mxu0 0.0
        %574 = vmatmul.mubr.f32.gmra.mrb[0].mxu0 %v474
        %v575 = vpop.f32.mrb[0].mxu0
        %v576 = vadd.f32 0.0, %v575
        %v577 = vpop.f32.mrb[0].mxu0
        %578 = vmatprep.mubr.f32.mxu0 0.0
        %579 = vmatmul.mubr.f32.gmra.mrb[0].mxu0 %v477
        %v580 = vpop.f32.mrb[0].mxu0
        %v581 = vadd.f32 0.0, %v580
        %v582 = vpop.f32.mrb[0].mxu0
        %583 = vdwg.mxu0
        %vm584 = vcmask 261120
        %585 = vst.msk [vmem:[%s218] sm:$0xff] %vm584, %v546
        %586 = vst.msk [vmem:[%s218 + $0x8] sm:$0xff] %vm584, %v551
        %587 = vst.msk [vmem:[%s218 + $0x10] sm:$0xff] %vm584, %v556
        %588 = vst.msk [vmem:[%s218 + $0x18] sm:$0xff] %vm584, %v561
        %589 = vst.msk [vmem:[%s218 + $0x20] sm:$0xff] %vm584, %v566
        %590 = vst.msk [vmem:[%s218 + $0x28] sm:$0xff] %vm584, %v571
        %591 = vst.msk [vmem:[%s218 + $0x30] sm:$0xff] %vm584, %v576
        %592 = vst.msk [vmem:[%s218 + $0x38] sm:$0xff] %vm584, %v581
        %s593 = sand.u32 %s97, 1
        %s594 = scalar_lea.sflag [#allocation4], %s593
        %s595 = sand.u32 %s97, 1
        %s596 = smul.addr %s595, 64
        %s597 = scalar_lea.vmem [#allocation8], %s596
        // Predicated region
        $region45: #{interpolate.1} parent=31 // pred_check
          %p598 = pneg %p107
        $region46: #{interpolate.1} parent=31 // pred_check_branch
          %600 = sbr.rel (%p598) target = $region48
        $region47: #{interpolate.1} parent=31 // pred_region
          %s601 = smul.u32 2, %s21
          %s603 = ssub.s32 1024, 1024
          %604 = vsyncadd %s594, %s603
          %s605 = smul.addr %s601, 4
          %s606 = smul.addr %s605, 128
          %s607 = scalar_lea.hbm %s3, %s606
          %s608 = sshll.u32 %s597, 4
          %s609 = int_to_ptr.vmem [resolvable:$true] %s608
          %614 = dma.vmem_to_hbm [thread:$0]  %s609, 1024, %s607, %s594, 128, 128, 8
        $region48: #{interpolate.1} parent=31 // pred_fallthru
          _
      $region32: #{interpolate.1} parent=5 // pred_fallthru
        _
      %p615 = scmp.le.s32.totalorder 2, %s16
      // Predicated region
      $region49: #{interpolate.1} parent=5 // pred_check
        %p616 = pneg %p615
      $region50: #{interpolate.1} parent=5 // pred_check_branch
        %618 = sbr.rel (%p616) target = $region52
      $region51: #{interpolate.1} parent=5 // pred_region
        %s619 = ssub.s32 %s16, 2
        // Predicated region
        $region53: #{interpolate.1} parent=51 // pred_check
          %p620 = pneg %p113
        $region54: #{interpolate.1} parent=51 // pred_check_branch
          %622 = sbr.rel (%p620) target = $region56
        $region55: #{interpolate.1} parent=51 // pred_region
          %s623 = sand.u32 %s98, 1
          %s624 = scalar_lea.sflag [#allocation4], %s623
          %s625 = sand.u32 %s98, 1
          %s626 = smul.addr %s625, 64
          %s627 = scalar_lea.vmem [#allocation8], %s626
          %628 = dma.done %s624, 1024
        $region56: #{interpolate.1} parent=51 // pred_fallthru
          _
      $region52: #{interpolate.1} parent=5 // pred_fallthru
        _
    $region6: #{interpolate.1} parent=1 // loop_footer
      %s20 = sadd.s32 1, %s16
    $region7: #{interpolate.1} parent=1 // loop_footer_branch
      %15 = sbr.rel target = $region3
    $region8: #{interpolate.1} parent=1 // loop_exit
      _
    %629 = vsyncpa [#allocation3], 1
    %s630 = scalar_lea.sflag [#allocation3], 1
    %631 = vsyncpa %s630, 1
    %632 = vsyncpa [#allocation6], 1
    %633 = vsyncpa [#allocation4], 1
    %s634 = scalar_lea.sflag [#allocation4], 1
    %635 = vsyncpa %s634, 1

</llo_original>
